<compile_context>
chip_gen: v7x
topology: tpu7x:2x2x1
jax: 0.10.0
libtpu: 0.0.40
codegen_flags: <defaults>
</compile_context>

<pallas_src>
import jax
import jax.numpy as jnp
from jax.experimental import pallas as pl
from jax.experimental.pallas import tpu as pltpu

H = 18        # padded feature width used for every layer
W_ROWS = 72   # packed weight slab rows (sections start at sublane multiples of 8)
V_COLS = 8    # packed bias / fc4-weight matrix columns


def mlp_kernel(xT_ref, w_ref, v_ref, o_ref):
    # xT_ref: (H, TILE_B)  transposed, feature-padded input tile
    # w_ref : (W_ROWS, H)  packed weights (fc1 | fc2 | fc3, zero padded)
    # v_ref : (H, V_COLS)  packed biases and fc4 weight (stored as columns)
    # o_ref : (1, TILE_B)  lane-dense output row
    w = w_ref[...]
    v = v_ref[...]
    w1 = w[0:18, :]      # (18, 18): [:, :10] = fc1.weight, rest zero
    w2 = w[24:42, :]     # (18, 18)           = fc2.weight
    w3 = w[48:66, :]     # (18, 18): [:4, :]  = fc3.weight, rest zero
    b1 = v[:, 0:1]       # (18, 1)
    b2 = v[:, 1:2]       # (18, 1)
    b3 = v[:, 2:3]       # (18, 1): rows 4: are zero
    w4 = v[:, 3:4]       # (18, 1): rows :4 = fc4.weight, rest zero
    b4 = v[0:1, 4:5]     # (1, 1)

    xT = xT_ref[...]                                                   # (18, TILE_B)
    h = jnp.maximum(jnp.dot(w1, xT, preferred_element_type=jnp.float32) + b1, 0.0)
    h = jnp.maximum(jnp.dot(w2, h, preferred_element_type=jnp.float32) + b2, 0.0)
    h = jnp.maximum(jnp.dot(w3, h, preferred_element_type=jnp.float32) + b3, 0.0)
    # fc4: (4 -> 1) is far too small for the MXU -> VPU multiply + XLU reduce.
    out = jnp.sum(h * w4, axis=0, keepdims=True) + b4                  # (1, TILE_B)
    o_ref[...] = out.astype(o_ref.dtype)


def simple_model_forward(x, params, *, tile_b=None):
    """x: (B, 10) f32; params: ((w1,b1),...,(w4,b4)) in PyTorch (out,in)/(out,) layout."""
    (w1, b1), (w2, b2), (w3, b3), (w4, b4) = params
    B = x.shape[0]
    if tile_b is None:
        tile_b = 512 if B >= 512 else 128     # multiple of 128 (lane width)
    num_tiles = pl.cdiv(B, tile_b)
    b_pad = num_tiles * tile_b

    # Pack all weights into a single slab (sections aligned to sublane multiples of 8).
    wslab = jnp.zeros((W_ROWS, H), jnp.float32)
    wslab = wslab.at[0:18, 0:10].set(w1)      # fc1: (18, 10)
    wslab = wslab.at[24:42, 0:18].set(w2)     # fc2: (18, 18)
    wslab = wslab.at[48:52, 0:18].set(w3)     # fc3: (4, 18)
    # Pack biases and the tiny fc4 weight as columns of one small matrix.
    vecs = jnp.zeros((H, V_COLS), jnp.float32)
    vecs = vecs.at[0:18, 0].set(b1)
    vecs = vecs.at[0:18, 1].set(b2)
    vecs = vecs.at[0:4, 2].set(b3)
    vecs = vecs.at[0:4, 3].set(w4[0, :])      # fc4 weight (1, 4) stored as a column
    vecs = vecs.at[0, 4].set(b4[0])

    # Transposed, feature- and batch-padded input: (H, b_pad), batch on the lane axis.
    xT = jnp.zeros((H, b_pad), jnp.float32).at[0:10, 0:B].set(x.T)

    out_row = pl.pallas_call(
        mlp_kernel,
        out_shape=jax.ShapeDtypeStruct((1, b_pad), jnp.float32),
        grid=(num_tiles,),
        in_specs=[
            pl.BlockSpec((H, tile_b), lambda i: (0, i)),        # streamed x tiles
            pl.BlockSpec((W_ROWS, H), lambda i: (0, 0)),        # resident packed weights
            pl.BlockSpec((H, V_COLS), lambda i: (0, 0)),        # resident biases / fc4
        ],
        out_specs=pl.BlockSpec((1, tile_b), lambda i: (0, i)),  # lane-dense output row
        compiler_params=pltpu.CompilerParams(
            dimension_semantics=("parallel",),                  # shard batch across TCs (v7x)
        ),
    )(xT, wslab, vecs)
    return out_row[0, :B].reshape(B, 1)


def init_linear(key, in_features, out_features):
    # PyTorch nn.Linear default init: U(-1/sqrt(fan_in), 1/sqrt(fan_in));
    # weight stored (out_features, in_features), bias (out_features,).
    kw, kb = jax.random.split(key)
    bound = 1.0 / float(in_features) ** 0.5
    w = jax.random.uniform(kw, (out_features, in_features), jnp.float32, -bound, bound)
    b = jax.random.uniform(kb, (out_features,), jnp.float32, -bound, bound)
    return w, b


if __name__ == "__main__":
    key = jax.random.PRNGKey(0)
    k_x, k1, k2, k3, k4 = jax.random.split(key, 5)

    B = 8
    x = jax.random.normal(k_x, (B, 10), dtype=jnp.float32)
    params = (
        init_linear(k1, 10, 18),
        init_linear(k2, 18, 18),
        init_linear(k3, 18, 4),
        init_linear(k4, 4, 1),
    )

    out = simple_model_forward(x, params)
    out = jax.block_until_ready(out)

    # Pure-JAX reference (same math as the PyTorch module).
    h = x
    for i, (w, b) in enumerate(params):
        h = h @ w.T + b
        if i < 3:
            h = jnp.maximum(h, 0.0)
    assert out.shape == (B, 1)
    assert jnp.allclose(out, h, atol=1e-5, rtol=1e-5)

    print("KERNEL_OK")
</pallas_src>

<mosaic_0001>
module attributes {stable_mosaic.version = 11 : i64} {
  func.func @mlp_kernel(%arg0: i32, %arg1: memref<18x128xf32, #tpu.memory_space<vmem>>, %arg2: memref<72x18xf32, #tpu.memory_space<vmem>>, %arg3: memref<18x8xf32, #tpu.memory_space<vmem>>, %arg4: memref<1x128xf32, #tpu.memory_space<vmem>>) attributes {dimension_semantics = [#tpu.dimension_semantics<parallel>], iteration_bounds = array<i64: 1>, scalar_prefetch = 0 : i64, scratch_operands = 0 : i64, tpu.core_type = #tpu.core_type<tc>, window_params = [{transform_indices = @transform_0, window_bounds = array<i64: 18, 128>}, {pipeline_mode = #tpu.pipeline_mode<synchronous>, transform_indices = @transform_1, window_bounds = array<i64: 72, 18>}, {pipeline_mode = #tpu.pipeline_mode<synchronous>, transform_indices = @transform_2, window_bounds = array<i64: 18, 8>}, {transform_indices = @transform_3, window_bounds = array<i64: 1, 128>}]} {
    %c0 = arith.constant 0 : index
    %c0_0 = arith.constant 0 : index
    %0 = vector.load %arg2[%c0, %c0_0] : memref<72x18xf32, #tpu.memory_space<vmem>>, vector<72x18xf32>
    %c0_1 = arith.constant 0 : index
    %c0_2 = arith.constant 0 : index
    %1 = vector.load %arg3[%c0_1, %c0_2] : memref<18x8xf32, #tpu.memory_space<vmem>>, vector<18x8xf32>
    %2 = vector.extract_strided_slice %0 {offsets = [0, 0], sizes = [18, 18], strides = [1, 1]} : vector<72x18xf32> to vector<18x18xf32>
    %3 = vector.extract_strided_slice %0 {offsets = [24, 0], sizes = [18, 18], strides = [1, 1]} : vector<72x18xf32> to vector<18x18xf32>
    %4 = vector.extract_strided_slice %0 {offsets = [48, 0], sizes = [18, 18], strides = [1, 1]} : vector<72x18xf32> to vector<18x18xf32>
    %5 = vector.extract_strided_slice %1 {offsets = [0, 0], sizes = [18, 1], strides = [1, 1]} : vector<18x8xf32> to vector<18x1xf32>
    %6 = vector.extract_strided_slice %1 {offsets = [0, 1], sizes = [18, 1], strides = [1, 1]} : vector<18x8xf32> to vector<18x1xf32>
    %7 = vector.extract_strided_slice %1 {offsets = [0, 2], sizes = [18, 1], strides = [1, 1]} : vector<18x8xf32> to vector<18x1xf32>
    %8 = vector.extract_strided_slice %1 {offsets = [0, 3], sizes = [18, 1], strides = [1, 1]} : vector<18x8xf32> to vector<18x1xf32>
    %9 = vector.extract_strided_slice %1 {offsets = [0, 4], sizes = [1, 1], strides = [1, 1]} : vector<18x8xf32> to vector<1x1xf32>
    %c0_3 = arith.constant 0 : index
    %c0_4 = arith.constant 0 : index
    %10 = vector.load %arg1[%c0_3, %c0_4] : memref<18x128xf32, #tpu.memory_space<vmem>>, vector<18x128xf32>
    %cst = arith.constant dense<0.000000e+00> : vector<18x128xf32>
    %11 = tpu.matmul %2, %10, %cst {dimension_numbers = #tpu.dot_dimension_numbers<[1], [0], [0], [1], [0, 0, 1, 1], [], []>} : vector<18x18xf32>, vector<18x128xf32>, vector<18x128xf32> -> vector<18x128xf32>
    %12 = vector.broadcast %5 : vector<18x1xf32> to vector<18x128xf32>
    %13 = arith.addf %11, %12 : vector<18x128xf32>
    %cst_5 = arith.constant 0.000000e+00 : f32
    %14 = vector.broadcast %cst_5 : f32 to vector<18x128xf32>
    %15 = arith.maximumf %13, %14 : vector<18x128xf32>
    %cst_6 = arith.constant dense<0.000000e+00> : vector<18x128xf32>
    %16 = tpu.matmul %3, %15, %cst_6 {dimension_numbers = #tpu.dot_dimension_numbers<[1], [0], [0], [1], [0, 0, 1, 1], [], []>} : vector<18x18xf32>, vector<18x128xf32>, vector<18x128xf32> -> vector<18x128xf32>
    %17 = vector.broadcast %6 : vector<18x1xf32> to vector<18x128xf32>
    %18 = arith.addf %16, %17 : vector<18x128xf32>
    %cst_7 = arith.constant 0.000000e+00 : f32
    %19 = vector.broadcast %cst_7 : f32 to vector<18x128xf32>
    %20 = arith.maximumf %18, %19 : vector<18x128xf32>
    %cst_8 = arith.constant dense<0.000000e+00> : vector<18x128xf32>
    %21 = tpu.matmul %4, %20, %cst_8 {dimension_numbers = #tpu.dot_dimension_numbers<[1], [0], [0], [1], [0, 0, 1, 1], [], []>} : vector<18x18xf32>, vector<18x128xf32>, vector<18x128xf32> -> vector<18x128xf32>
    %22 = vector.broadcast %7 : vector<18x1xf32> to vector<18x128xf32>
    %23 = arith.addf %21, %22 : vector<18x128xf32>
    %cst_9 = arith.constant 0.000000e+00 : f32
    %24 = vector.broadcast %cst_9 : f32 to vector<18x128xf32>
    %25 = arith.maximumf %23, %24 : vector<18x128xf32>
    %26 = vector.broadcast %8 : vector<18x1xf32> to vector<18x128xf32>
    %27 = arith.mulf %25, %26 : vector<18x128xf32>
    %cst_10 = arith.constant dense<0.000000e+00> : vector<128xf32>
    %28 = vector.multi_reduction <add>, %27, %cst_10 [0] : vector<18x128xf32> to vector<128xf32>
    %29 = vector.shape_cast %28 : vector<128xf32> to vector<1x128xf32>
    %30 = vector.broadcast %9 : vector<1x1xf32> to vector<1x128xf32>
    %31 = arith.addf %29, %30 : vector<1x128xf32>
    %c0_11 = arith.constant 0 : index
    %c0_12 = arith.constant 0 : index
    %32 = vector.load %arg4[%c0_11, %c0_12] : memref<1x128xf32, #tpu.memory_space<vmem>>, vector<1x128xf32>
    tpu.vector_store %arg4[%c0_11, %c0_12], %31 {strides = array<i32>} : memref<1x128xf32, #tpu.memory_space<vmem>>, vector<1x128xf32>,
    return
  }
  func.func @transform_0(%arg0: i32) -> (i32, i32) {
    %c0_i32 = arith.constant 0 : i32
    %c0_i32_0 = arith.constant 0 : i32
    return %c0_i32, %arg0 : i32, i32
  }
  func.func @transform_1(%arg0: i32) -> (i32, i32) {
    %c0_i32 = arith.constant 0 : i32
    %c0_i32_0 = arith.constant 0 : i32
    %c0_i32_1 = arith.constant 0 : i32
    return %c0_i32, %c0_i32_0 : i32, i32
  }
  func.func @transform_2(%arg0: i32) -> (i32, i32) {
    %c0_i32 = arith.constant 0 : i32
    %c0_i32_0 = arith.constant 0 : i32
    %c0_i32_1 = arith.constant 0 : i32
    return %c0_i32, %c0_i32_0 : i32, i32
  }
  func.func @transform_3(%arg0: i32) -> (i32, i32) {
    %c0_i32 = arith.constant 0 : i32
    %c0_i32_0 = arith.constant 0 : i32
    return %c0_i32, %arg0 : i32, i32
  }
}

</mosaic_0001>

<llo_original>
// kernel: tpu_custom_call.1
$region0: #{tpu_custom_call.1}
  #allocation0 [shape = 'u32[]', space=smem, size = 0x4, offset = 0x4, fixed_abs, tag = 'smem constant byte address 0x4 - core index']
  #allocation1 [shape = 'u32[144,128]{1,0:T(1,128)}', space=vmem, size = 0x12000, scoped, tag = 'internal scratch']
  %s0 = inlined_call_operand.vmem [shape: f32[18,128], index: 0, kind: input, shape index: {}]
  %s1 = inlined_call_operand.vmem [shape: f32[72,18], index: 1, kind: input, shape index: {}]
  %s2 = inlined_call_operand.vmem [shape: f32[18,8], index: 2, kind: input, shape index: {}]
  %s3 = inlined_call_operand.hbm [shape: f32[1,128], index: 3, kind: output, shape index: {}]
  %s4 = sld [smem:[#allocation0]]
  $region22: #{tpu_custom_call.1} parent=0
    _
  %s6 = ssub.s32 1, %s4
  %s7 = scalar_select 0, %s6, %s4
  $region1: #{tpu_custom_call.1} parent=0
    #allocation2 [shape = 'u8[512]{0}', space=vmem, size = 0x400, scoped, tag = 'output window, operand 0, single buffered']
    #allocation3 [shape = 's32[1]{0}', space=sflag, size = 0x4, scoped, tag = 'scoped memory for tpu_custom_call.1']
    %8 = vsyncpa [#allocation3], 0
    // Predicated region
    $region2: #{tpu_custom_call.1} parent=1 // pred_check
      _
    $region3: #{tpu_custom_call.1} parent=1 // pred_check_branch
      %10 = sbr.rel (0) target = $region5
    $region4: #{tpu_custom_call.1} parent=1 // pred_region
      _
    $region5: #{tpu_custom_call.1} parent=1 // pred_fallthru
      _
    // Predicated region
    $region6: #{tpu_custom_call.1} parent=1 // pred_check
      _
    $region7: #{tpu_custom_call.1} parent=1 // pred_check_branch
      %12 = sbr.rel (0) target = $region9
    $region8: #{tpu_custom_call.1} parent=1 // pred_region
      _
    $region9: #{tpu_custom_call.1} parent=1 // pred_fallthru
      _
    // Predicated region
    $region10: #{tpu_custom_call.1} parent=1 // pred_check
      _
    $region11: #{tpu_custom_call.1} parent=1 // pred_check_branch
      %14 = sbr.rel (0) target = $region13
    $region12: #{tpu_custom_call.1} parent=1 // pred_region
      _
    $region13: #{tpu_custom_call.1} parent=1 // pred_fallthru
      _
    %v15 = vld [vmem:[%s1] sm:$0xff]
    %v16 = vld [vmem:[%s1 + $0x8] sm:$0xff]
    %v17 = vld [vmem:[%s1 + $0x10] sm:$0xff]
    %v18 = vld [vmem:[%s1 + $0x18] sm:$0xff]
    %v19 = vld [vmem:[%s1 + $0x20] sm:$0xff]
    %v20 = vld [vmem:[%s1 + $0x28] sm:$0xff]
    %v21 = vld [vmem:[%s1 + $0x30] sm:$0xff]
    %v22 = vld [vmem:[%s1 + $0x38] sm:$0xff]
    %v23 = vld [vmem:[%s1 + $0x40] sm:$0xff]
    %v24 = vld [vmem:[%s2] sm:$0xff]
    %v25 = vld [vmem:[%s2 + $0x8] sm:$0xff]
    %v26 = vld [vmem:[%s2 + $0x10] sm:$0x3]
    %v27 = vld [vmem:[%s0] sm:$0xff]
    %v28 = vld [vmem:[%s0 + $0x8] sm:$0xff]
    %v29 = vld [vmem:[%s0 + $0x10] sm:$0x3]
    %31 = vset.pattern.permute.xlu0 0
    %32 = vperm.xlu0 %31, %v24
    %v33 = vpop.permute.xlu0 %32
    %36 = vset.pattern.permute.xlu0 0
    %37 = vperm.xlu0 %36, %v25
    %v38 = vpop.permute.xlu0 %37
    %41 = vset.pattern.permute.xlu0 0
    %42 = vperm.xlu0 %41, %v26
    %v43 = vpop.permute.xlu0 %42
    %vm45 = vcmask 146432
    %v47 = vsel %vm45, %v15, 0
    %v50 = vsel %vm45, %v16, 0
    %v53 = vsel %vm45, %v17, 0
    %vm55 = vcmask 1041408
    %v57 = vsel %vm55, %v29, 0
    %59 = vmatprep.subr.mxu0 0.0
    %60 = vmatpush1.msra.mxu0 %v27
    %61 = vmatprep.subr.mxu0 0.0
    %62 = vmatpush1.msra.mxu0 %v28
    %63 = vmatprep.subr.mxu0 0.0
    %64 = vmatpush1.msra.mxu0 %v57
    %65 = vmatprep.subr.mxu0 0.0
    %66 = vmatpush1.msra.mxu0 0.0
    %67 = vmatprep.subr.mxu0 0.0
    %68 = vmatpush1.msra.mxu0 0.0
    %69 = vmatprep.subr.mxu0 0.0
    %70 = vmatpush1.msra.mxu0 0.0
    %71 = vmatprep.subr.mxu0 0.0
    %72 = vmatpush1.msra.mxu0 0.0
    %73 = vmatprep.subr.mxu0 0.0
    %74 = vmatpush1.msra.mxu0 0.0
    %75 = vmatprep.subr.mxu0 0.0
    %76 = vmatpush1.msra.mxu0 0.0
    %77 = vmatprep.subr.mxu0 0.0
    %78 = vmatpush1.msra.mxu0 0.0
    %79 = vmatprep.subr.mxu0 0.0
    %80 = vmatpush1.msra.mxu0 0.0
    %81 = vmatprep.subr.mxu0 0.0
    %82 = vmatpush1.msra.mxu0 0.0
    %83 = vmatprep.subr.mxu0 0.0
    %84 = vmatpush1.msra.mxu0 0.0
    %85 = vmatprep.subr.mxu0 0.0
    %86 = vmatpush1.msra.mxu0 0.0
    %87 = vmatprep.subr.mxu0 0.0
    %88 = vmatpush1.msra.mxu0 0.0
    %89 = vmatprep.subr.mxu0 0.0
    %90 = vmatpush1.msra.mxu0 0.0
    %91 = vmatprep.subr.mxu0 0.0
    %92 = vmatpush1.msra.mxu0 0.0
    %93 = vmatprep.subr.mxu0 0.0
    %94 = vmatpush1.msra.mxu0 0.0
    %95 = vmatprep.subr.mxu0 0.0
    %96 = vmatpush1.msra.mxu0 0.0
    %97 = vmatprep.subr.mxu0 0.0
    %98 = vmatpush1.msra.mxu0 0.0
    %99 = vmatprep.subr.mxu0 0.0
    %100 = vmatpush1.msra.mxu0 0.0
    %101 = vmatprep.subr.mxu0 0.0
    %102 = vmatpush1.msra.mxu0 0.0
    %103 = vmatprep.subr.mxu0 0.0
    %104 = vmatpush1.msra.mxu0 0.0
    %105 = vmatprep.subr.mxu0 0.0
    %106 = vmatpush1.msra.mxu0 0.0
    %107 = vmatprep.subr.mxu0 0.0
    %108 = vmatpush1.msra.mxu0 0.0
    %109 = vmatprep.subr.mxu0 0.0
    %110 = vmatpush1.msra.mxu0 0.0
    %111 = vmatprep.subr.mxu0 0.0
    %112 = vmatpush1.msra.mxu0 0.0
    %113 = vmatprep.subr.mxu0 0.0
    %114 = vmatpush1.msra.mxu0 0.0
    %115 = vmatprep.subr.mxu0 0.0
    %116 = vmatpush1.msra.mxu0 0.0
    %117 = vmatprep.subr.mxu0 0.0
    %118 = vmatpush1.msra.mxu0 0.0
    %119 = vmatprep.subr.mxu0 0.0
    %120 = vmatpush1.msra.mxu0 0.0
    %121 = vmatprep.subr.mxu0 0.0
    %122 = vmatpush1.msra.mxu0 0.0
    %123 = vmatprep.mubr.f32.mxu0 0.0
    %124 = vmatmul.mubr.f32.gmra.mrb[0].mxu0 %v47
    %v125 = vpop.f32.mrb[0].mxu0
    %v126 = vadd.f32 %v33, %v125
    %v127 = vpop.f32.mrb[0].mxu0
    %128 = vmatprep.mubr.f32.mxu0 0.0
    %129 = vmatmul.mubr.f32.gmra.mrb[0].mxu0 %v50
    %v130 = vpop.f32.mrb[0].mxu0
    %v131 = vadd.f32 %v38, %v130
    %v132 = vpop.f32.mrb[0].mxu0
    %133 = vmatprep.mubr.f32.mxu0 0.0
    %134 = vmatmul.mubr.f32.gmra.mrb[0].mxu0 %v53
    %v135 = vpop.f32.mrb[0].mxu0
    %v136 = vadd.f32 %v43, %v135
    %v137 = vpop.f32.mrb[0].mxu0
    %138 = vdwg.mxu0
    %v139 = vmax.f32 %v126, 0.0
    %v140 = vmax.f32 %v131, 0.0
    %v141 = vmax.f32 %v136, 0.0
    %142 = vset.pattern.permute.xlu0 1
    %143 = vperm.xlu0 %142, %v24
    %v144 = vpop.permute.xlu0 %143
    %146 = vset.pattern.permute.xlu0 1
    %147 = vperm.xlu0 %146, %v25
    %v148 = vpop.permute.xlu0 %147
    %150 = vset.pattern.permute.xlu0 1
    %151 = vperm.xlu0 %150, %v26
    %v152 = vpop.permute.xlu0 %151
    %v155 = vsel %vm45, %v18, 0
    %v158 = vsel %vm45, %v19, 0
    %v161 = vsel %vm45, %v20, 0
    %v164 = vsel %vm55, %v141, 0
    %166 = vmatprep.subr.mxu0 0.0
    %167 = vmatpush1.msra.mxu0 %v139
    %168 = vmatprep.subr.mxu0 0.0
    %169 = vmatpush1.msra.mxu0 %v140
    %170 = vmatprep.subr.mxu0 0.0
    %171 = vmatpush1.msra.mxu0 %v164
    %172 = vmatprep.subr.mxu0 0.0
    %173 = vmatpush1.msra.mxu0 0.0
    %174 = vmatprep.subr.mxu0 0.0
    %175 = vmatpush1.msra.mxu0 0.0
    %176 = vmatprep.subr.mxu0 0.0
    %177 = vmatpush1.msra.mxu0 0.0
    %178 = vmatprep.subr.mxu0 0.0
    %179 = vmatpush1.msra.mxu0 0.0
    %180 = vmatprep.subr.mxu0 0.0
    %181 = vmatpush1.msra.mxu0 0.0
    %182 = vmatprep.subr.mxu0 0.0
    %183 = vmatpush1.msra.mxu0 0.0
    %184 = vmatprep.subr.mxu0 0.0
    %185 = vmatpush1.msra.mxu0 0.0
    %186 = vmatprep.subr.mxu0 0.0
    %187 = vmatpush1.msra.mxu0 0.0
    %188 = vmatprep.subr.mxu0 0.0
    %189 = vmatpush1.msra.mxu0 0.0
    %190 = vmatprep.subr.mxu0 0.0
    %191 = vmatpush1.msra.mxu0 0.0
    %192 = vmatprep.subr.mxu0 0.0
    %193 = vmatpush1.msra.mxu0 0.0
    %194 = vmatprep.subr.mxu0 0.0
    %195 = vmatpush1.msra.mxu0 0.0
    %196 = vmatprep.subr.mxu0 0.0
    %197 = vmatpush1.msra.mxu0 0.0
    %198 = vmatprep.subr.mxu0 0.0
    %199 = vmatpush1.msra.mxu0 0.0
    %200 = vmatprep.subr.mxu0 0.0
    %201 = vmatpush1.msra.mxu0 0.0
    %202 = vmatprep.subr.mxu0 0.0
    %203 = vmatpush1.msra.mxu0 0.0
    %204 = vmatprep.subr.mxu0 0.0
    %205 = vmatpush1.msra.mxu0 0.0
    %206 = vmatprep.subr.mxu0 0.0
    %207 = vmatpush1.msra.mxu0 0.0
    %208 = vmatprep.subr.mxu0 0.0
    %209 = vmatpush1.msra.mxu0 0.0
    %210 = vmatprep.subr.mxu0 0.0
    %211 = vmatpush1.msra.mxu0 0.0
    %212 = vmatprep.subr.mxu0 0.0
    %213 = vmatpush1.msra.mxu0 0.0
    %214 = vmatprep.subr.mxu0 0.0
    %215 = vmatpush1.msra.mxu0 0.0
    %216 = vmatprep.subr.mxu0 0.0
    %217 = vmatpush1.msra.mxu0 0.0
    %218 = vmatprep.subr.mxu0 0.0
    %219 = vmatpush1.msra.mxu0 0.0
    %220 = vmatprep.subr.mxu0 0.0
    %221 = vmatpush1.msra.mxu0 0.0
    %222 = vmatprep.subr.mxu0 0.0
    %223 = vmatpush1.msra.mxu0 0.0
    %224 = vmatprep.subr.mxu0 0.0
    %225 = vmatpush1.msra.mxu0 0.0
    %226 = vmatprep.subr.mxu0 0.0
    %227 = vmatpush1.msra.mxu0 0.0
    %228 = vmatprep.subr.mxu0 0.0
    %229 = vmatpush1.msra.mxu0 0.0
    %230 = vmatprep.mubr.f32.mxu0 0.0
    %231 = vmatmul.mubr.f32.gmra.mrb[0].mxu0 %v155
    %v232 = vpop.f32.mrb[0].mxu0
    %v233 = vadd.f32 %v144, %v232
    %v234 = vpop.f32.mrb[0].mxu0
    %235 = vmatprep.mubr.f32.mxu0 0.0
    %236 = vmatmul.mubr.f32.gmra.mrb[0].mxu0 %v158
    %v237 = vpop.f32.mrb[0].mxu0
    %v238 = vadd.f32 %v148, %v237
    %v239 = vpop.f32.mrb[0].mxu0
    %240 = vmatprep.mubr.f32.mxu0 0.0
    %241 = vmatmul.mubr.f32.gmra.mrb[0].mxu0 %v161
    %v242 = vpop.f32.mrb[0].mxu0
    %v243 = vadd.f32 %v152, %v242
    %v244 = vpop.f32.mrb[0].mxu0
    %245 = vdwg.mxu0
    %v246 = vmax.f32 %v233, 0.0
    %v247 = vmax.f32 %v238, 0.0
    %v248 = vmax.f32 %v243, 0.0
    %249 = vset.pattern.permute.xlu0 2
    %250 = vperm.xlu0 %249, %v24
    %v251 = vpop.permute.xlu0 %250
    %253 = vset.pattern.permute.xlu0 2
    %254 = vperm.xlu0 %253, %v25
    %v255 = vpop.permute.xlu0 %254
    %257 = vset.pattern.permute.xlu0 2
    %258 = vperm.xlu0 %257, %v26
    %v259 = vpop.permute.xlu0 %258
    %v262 = vsel %vm45, %v21, 0
    %v265 = vsel %vm45, %v22, 0
    %v268 = vsel %vm45, %v23, 0
    %v271 = vsel %vm55, %v248, 0
    %273 = vmatprep.subr.mxu0 0.0
    %274 = vmatpush1.msra.mxu0 %v246
    %275 = vmatprep.subr.mxu0 0.0
    %276 = vmatpush1.msra.mxu0 %v247
    %277 = vmatprep.subr.mxu0 0.0
    %278 = vmatpush1.msra.mxu0 %v271
    %279 = vmatprep.subr.mxu0 0.0
    %280 = vmatpush1.msra.mxu0 0.0
    %281 = vmatprep.subr.mxu0 0.0
    %282 = vmatpush1.msra.mxu0 0.0
    %283 = vmatprep.subr.mxu0 0.0
    %284 = vmatpush1.msra.mxu0 0.0
    %285 = vmatprep.subr.mxu0 0.0
    %286 = vmatpush1.msra.mxu0 0.0
    %287 = vmatprep.subr.mxu0 0.0
    %288 = vmatpush1.msra.mxu0 0.0
    %289 = vmatprep.subr.mxu0 0.0
    %290 = vmatpush1.msra.mxu0 0.0
    %291 = vmatprep.subr.mxu0 0.0
    %292 = vmatpush1.msra.mxu0 0.0
    %293 = vmatprep.subr.mxu0 0.0
    %294 = vmatpush1.msra.mxu0 0.0
    %295 = vmatprep.subr.mxu0 0.0
    %296 = vmatpush1.msra.mxu0 0.0
    %297 = vmatprep.subr.mxu0 0.0
    %298 = vmatpush1.msra.mxu0 0.0
    %299 = vmatprep.subr.mxu0 0.0
    %300 = vmatpush1.msra.mxu0 0.0
    %301 = vmatprep.subr.mxu0 0.0
    %302 = vmatpush1.msra.mxu0 0.0
    %303 = vmatprep.subr.mxu0 0.0
    %304 = vmatpush1.msra.mxu0 0.0
    %305 = vmatprep.subr.mxu0 0.0
    %306 = vmatpush1.msra.mxu0 0.0
    %307 = vmatprep.subr.mxu0 0.0
    %308 = vmatpush1.msra.mxu0 0.0
    %309 = vmatprep.subr.mxu0 0.0
    %310 = vmatpush1.msra.mxu0 0.0
    %311 = vmatprep.subr.mxu0 0.0
    %312 = vmatpush1.msra.mxu0 0.0
    %313 = vmatprep.subr.mxu0 0.0
    %314 = vmatpush1.msra.mxu0 0.0
    %315 = vmatprep.subr.mxu0 0.0
    %316 = vmatpush1.msra.mxu0 0.0
    %317 = vmatprep.subr.mxu0 0.0
    %318 = vmatpush1.msra.mxu0 0.0
    %319 = vmatprep.subr.mxu0 0.0
    %320 = vmatpush1.msra.mxu0 0.0
    %321 = vmatprep.subr.mxu0 0.0
    %322 = vmatpush1.msra.mxu0 0.0
    %323 = vmatprep.subr.mxu0 0.0
    %324 = vmatpush1.msra.mxu0 0.0
    %325 = vmatprep.subr.mxu0 0.0
    %326 = vmatpush1.msra.mxu0 0.0
    %327 = vmatprep.subr.mxu0 0.0
    %328 = vmatpush1.msra.mxu0 0.0
    %329 = vmatprep.subr.mxu0 0.0
    %330 = vmatpush1.msra.mxu0 0.0
    %331 = vmatprep.subr.mxu0 0.0
    %332 = vmatpush1.msra.mxu0 0.0
    %333 = vmatprep.subr.mxu0 0.0
    %334 = vmatpush1.msra.mxu0 0.0
    %335 = vmatprep.subr.mxu0 0.0
    %336 = vmatpush1.msra.mxu0 0.0
    %337 = vmatprep.mubr.f32.mxu0 0.0
    %338 = vmatmul.mubr.f32.gmra.mrb[0].mxu0 %v262
    %v339 = vpop.f32.mrb[0].mxu0
    %v340 = vadd.f32 %v251, %v339
    %v341 = vpop.f32.mrb[0].mxu0
    %342 = vmatprep.mubr.f32.mxu0 0.0
    %343 = vmatmul.mubr.f32.gmra.mrb[0].mxu0 %v265
    %v344 = vpop.f32.mrb[0].mxu0
    %v345 = vadd.f32 %v255, %v344
    %v346 = vpop.f32.mrb[0].mxu0
    %347 = vmatprep.mubr.f32.mxu0 0.0
    %348 = vmatmul.mubr.f32.gmra.mrb[0].mxu0 %v268
    %v349 = vpop.f32.mrb[0].mxu0
    %v350 = vadd.f32 %v259, %v349
    %v351 = vpop.f32.mrb[0].mxu0
    %352 = vdwg.mxu0
    %v353 = vmax.f32 %v340, 0.0
    %v354 = vmax.f32 %v345, 0.0
    %v355 = vmax.f32 %v350, 0.0
    %356 = vset.pattern.permute.xlu0 3
    %357 = vperm.xlu0 %356, %v24
    %v358 = vpop.permute.xlu0 %357
    %360 = vset.pattern.permute.xlu0 3
    %361 = vperm.xlu0 %360, %v25
    %v362 = vpop.permute.xlu0 %361
    %364 = vset.pattern.permute.xlu0 3
    %365 = vperm.xlu0 %364, %v26
    %v366 = vpop.permute.xlu0 %365
    %v368 = vmul.f32 %v353, %v358
    %v369 = vmul.f32 %v354, %v362
    %v370 = vmul.f32 %v355, %v366
    %v371 = vadd.f32 %v368, %v369
    %v372 = vsel %vm55, %v370, 0.0
    %v373 = vadd.f32 %v371, %v372
    %v374 = vrot.slane %v373, 4
    %v375 = vadd.f32 %v373, %v374
    %v376 = vrot.slane %v375, 2
    %v377 = vadd.f32 %v375, %v376
    %v378 = vrot.slane %v377, 1
    %v379 = vadd.f32 %v377, %v378
    %380 = vset.pattern.permute.xlu0 4
    %381 = vperm.xlu0 %380, %v24
    %v382 = vpop.permute.xlu0 %381
    %v384 = vadd.f32 %v379, %v382
    %385 = vst [vmem:[#allocation2] sm:$0x1] %v384
    // Predicated region
    $region14: #{tpu_custom_call.1} parent=1 // pred_check
      _
    $region15: #{tpu_custom_call.1} parent=1 // pred_check_branch
      %387 = sbr.rel (0) target = $region17
    $region16: #{tpu_custom_call.1} parent=1 // pred_region
      %s389 = ssub.s32 16, 16
      %390 = vsyncadd [#allocation3], %s389
      %s392 = sshll.u32 [#allocation2], 4
      %s393 = int_to_ptr.vmem [resolvable:$true] %s392
      %395 = dma.vmem_to_hbm [thread:$0]  %s393, 16, %s3, [#allocation3]
    $region17: #{tpu_custom_call.1} parent=1 // pred_fallthru
      _
    // Predicated region
    $region18: #{tpu_custom_call.1} parent=1 // pred_check
      _
    $region19: #{tpu_custom_call.1} parent=1 // pred_check_branch
      %397 = sbr.rel (0) target = $region21
    $region20: #{tpu_custom_call.1} parent=1 // pred_region
      %398 = dma.done [#allocation3], 16
    $region21: #{tpu_custom_call.1} parent=1 // pred_fallthru
      _
    %399 = vsyncpa [#allocation3], 1

</llo_original>
